<compile_context>
chip_gen: v7x
topology: tpu7x:2x2x1
jax: 0.10.0
libtpu: 0.0.40
codegen_flags: <defaults>
</compile_context>

<pallas_src>
import jax
import jax.numpy as jnp
from jax.experimental import pallas as pl
from jax.experimental.pallas import tpu as pltpu

INPUT_SIZE = 100
HIDDEN_SIZE = 64
MEMORY_SIZE = 32

SUBLANE = 8            # f32 sublane granularity for the batch tile
MAX_BATCH_TILE = 1024  # rows per grid step (multiple of 8)


def _round_up(n, m):
    return ((n + m - 1) // m) * m


def _sigmoid(z):
    # One EUP tanh per element, no divide / Newton iterations on the VPU.
    return 0.5 * jnp.tanh(0.5 * z) + 0.5


def _hippocampus_kernel(
    x_ref,             # (TM, INPUT_SIZE)            f32
    w1_ref, b1_ref,    # (IN, HID) bf16, (1, HID)    f32
    w2_ref, b2_ref,    # (HID, MEM) bf16, (1, MEM)   f32
    w3_ref, b3_ref,    # (MEM, HID) bf16, (1, HID)   f32
    w4_ref, b4_ref,    # (HID, IN) bf16, (1, IN)     f32
    enc_ref,           # out: (TM, MEMORY_SIZE)      f32
    dec_ref,           # out: (TM, INPUT_SIZE)       f32
):
    x = x_ref[...].astype(jnp.bfloat16)

    # --- encoder ---
    h1 = jnp.dot(x, w1_ref[...], preferred_element_type=jnp.float32) + b1_ref[...]
    h1 = jnp.maximum(h1, 0.0)                                    # ReLU
    z = jnp.dot(h1.astype(jnp.bfloat16), w2_ref[...],
                preferred_element_type=jnp.float32) + b2_ref[...]
    encoded = _sigmoid(z)                                        # Sigmoid (EUP tanh)

    # --- decoder ---
    h2 = jnp.dot(encoded.astype(jnp.bfloat16), w3_ref[...],
                 preferred_element_type=jnp.float32) + b3_ref[...]
    h2 = jnp.maximum(h2, 0.0)                                    # ReLU
    d = jnp.dot(h2.astype(jnp.bfloat16), w4_ref[...],
                preferred_element_type=jnp.float32) + b4_ref[...]
    decoded = _sigmoid(d)                                        # Sigmoid

    enc_ref[...] = encoded.astype(enc_ref.dtype)
    dec_ref[...] = decoded.astype(dec_ref.dtype)


def prepare_params(params):
    """One-time parameter prep (call once, outside the per-forward path).

    Weights -> bf16 (MXU-native on all TPU generations, halves weight DMA),
    biases  -> f32 shaped (1, out) so they broadcast onto the f32 accumulator.
    """
    return tuple(
        (w.astype(jnp.bfloat16), b.astype(jnp.float32).reshape(1, -1))
        for (w, b) in params
    )


def hippocampal_hemisphere_forward(x, prepared_params, *, max_batch_tile=MAX_BATCH_TILE):
    """Autoencoder forward as a single batch-tiled Pallas kernel.

    `prepared_params` must come from `prepare_params` (bf16 weights, f32 biases).
    Returns (encoded, decoded) with shapes (batch, MEMORY_SIZE), (batch, INPUT_SIZE).
    """
    (w1, b1), (w2, b2), (w3, b3), (w4, b4) = prepared_params
    batch = x.shape[0]

    # Batch tiling: multiple of 8 rows.  For larger batches cap the tile at
    # ~half the padded batch so the grid always has >= 2 steps and the
    # "parallel" axis can be sharded across both v7x TensorCores.
    rows = _round_up(batch, SUBLANE)
    if rows > SUBLANE:
        half = _round_up(pl.cdiv(rows, 2), SUBLANE)
        tm = min(max_batch_tile, half)
    else:
        tm = rows
    num_tiles = pl.cdiv(batch, tm)
    padded_batch = num_tiles * tm

    x = x.astype(jnp.float32)
    if padded_batch != batch:
        x = jnp.pad(x, ((0, padded_batch - batch), (0, 0)))

    # Batch-tiled specs for activations (full true feature width: block last dim
    # equals the array dim, so no lane padding and no post-kernel slice pass).
    def io_spec(width):
        return pl.BlockSpec((tm, width), lambda i: (i, 0))

    # Constant-index specs for weights/biases: loaded once, resident in VMEM
    # across the whole batch loop.
    def const_spec(shape):
        return pl.BlockSpec(shape, lambda i: (0, 0))

    weight_bytes = sum(
        int(w.size) * w.dtype.itemsize + int(b.size) * b.dtype.itemsize
        for (w, b) in prepared_params
    )

    # VMEM budget: double-buffered x/enc/dec tiles + ~6 tile-sized in-kernel
    # intermediates (counted generously at 128 lanes) + weights, with headroom.
    io_tile_bytes = 2 * tm * 4 * (INPUT_SIZE + MEMORY_SIZE + INPUT_SIZE)
    interm_bytes = 8 * tm * 128 * 4
    vmem_limit = int(min(32 * 1024 * 1024,
                         max(16 * 1024 * 1024,
                             2 * (io_tile_bytes + interm_bytes + weight_bytes))))

    flops_per_row = 2 * (INPUT_SIZE * HIDDEN_SIZE + HIDDEN_SIZE * MEMORY_SIZE
                         + MEMORY_SIZE * HIDDEN_SIZE + HIDDEN_SIZE * INPUT_SIZE)
    cost = pl.CostEstimate(
        flops=int(padded_batch * flops_per_row),
        transcendentals=int(padded_batch * (MEMORY_SIZE + INPUT_SIZE)),
        bytes_accessed=int(padded_batch * 4 * (2 * INPUT_SIZE + MEMORY_SIZE)
                           + weight_bytes),
    )

    encoded_p, decoded_p = pl.pallas_call(
        _hippocampus_kernel,
        grid=(num_tiles,),
        out_shape=(
            jax.ShapeDtypeStruct((padded_batch, MEMORY_SIZE), jnp.float32),
            jax.ShapeDtypeStruct((padded_batch, INPUT_SIZE), jnp.float32),
        ),
        in_specs=[
            io_spec(INPUT_SIZE),
            const_spec(w1.shape), const_spec(b1.shape),
            const_spec(w2.shape), const_spec(b2.shape),
            const_spec(w3.shape), const_spec(b3.shape),
            const_spec(w4.shape), const_spec(b4.shape),
        ],
        out_specs=(io_spec(MEMORY_SIZE), io_spec(INPUT_SIZE)),
        compiler_params=pltpu.CompilerParams(
            dimension_semantics=("parallel",),   # shard batch tiles across TCs (v7x)
            vmem_limit_bytes=vmem_limit,
        ),
        cost_estimate=cost,
    )(x, w1, b1, w2, b2, w3, b3, w4, b4)

    if padded_batch != batch:
        encoded_p = encoded_p[:batch]
        decoded_p = decoded_p[:batch]
    return encoded_p, decoded_p


def init_params(key):
    """Deterministic init mimicking PyTorch nn.Linear default:
    U(-1/sqrt(fan_in), 1/sqrt(fan_in)) for both weights and biases. (f32)"""
    def linear(key, fan_in, fan_out):
        kw, kb = jax.random.split(key)
        bound = 1.0 / jnp.sqrt(jnp.float32(fan_in))
        w = jax.random.uniform(kw, (fan_in, fan_out), jnp.float32, -bound, bound)
        b = jax.random.uniform(kb, (1, fan_out), jnp.float32, -bound, bound)
        return w, b

    k1, k2, k3, k4 = jax.random.split(key, 4)
    return (
        linear(k1, INPUT_SIZE, HIDDEN_SIZE),   # encoder Linear(input, hidden)
        linear(k2, HIDDEN_SIZE, MEMORY_SIZE),  # encoder Linear(hidden, memory)
        linear(k3, MEMORY_SIZE, HIDDEN_SIZE),  # decoder Linear(memory, hidden)
        linear(k4, HIDDEN_SIZE, INPUT_SIZE),   # decoder Linear(hidden, input)
    )


def reference_forward(x, params):
    """Plain-JAX f32 reference for correctness checking."""
    (w1, b1), (w2, b2), (w3, b3), (w4, b4) = params
    h1 = jnp.maximum(x @ w1 + b1, 0.0)
    enc = jax.nn.sigmoid(h1 @ w2 + b2)
    h2 = jnp.maximum(enc @ w3 + b3, 0.0)
    dec = jax.nn.sigmoid(h2 @ w4 + b4)
    return enc, dec


if __name__ == "__main__":
    key = jax.random.PRNGKey(0)
    k_params, k_x = jax.random.split(key)

    params = init_params(k_params)              # f32 reference params
    prepared = prepare_params(params)           # one-time bf16 prep (hoisted)

    fwd = jax.jit(hippocampal_hemisphere_forward)

    # Small batch (single grid step) and a larger ragged batch (multi-step grid
    # with batch padding, >=2 tiles for v7x megacore) share the same kernel.
    for batch in (8, 1000):
        x = jax.random.normal(jax.random.fold_in(k_x, batch),
                              (batch, INPUT_SIZE), jnp.float32)

        encoded, decoded = fwd(x, prepared)
        jax.block_until_ready((encoded, decoded))

        # sanity check vs pure-JAX f32 reference (bf16 matmuls => loose tol)
        enc_ref, dec_ref = reference_forward(x, params)
        assert encoded.shape == (batch, MEMORY_SIZE)
        assert decoded.shape == (batch, INPUT_SIZE)
        assert jnp.allclose(encoded, enc_ref, atol=1e-2, rtol=1e-2)
        assert jnp.allclose(decoded, dec_ref, atol=1e-2, rtol=1e-2)

    print("KERNEL_OK")
</pallas_src>

<mosaic_0001>
module attributes {stable_mosaic.version = 11 : i64} {
  func.func @_hippocampus_kernel(%arg0: i32, %arg1: memref<8x100xf32, #tpu.memory_space<vmem>>, %arg2: memref<100x64xbf16, #tpu.memory_space<vmem>>, %arg3: memref<1x64xf32, #tpu.memory_space<vmem>>, %arg4: memref<64x32xbf16, #tpu.memory_space<vmem>>, %arg5: memref<1x32xf32, #tpu.memory_space<vmem>>, %arg6: memref<32x64xbf16, #tpu.memory_space<vmem>>, %arg7: memref<1x64xf32, #tpu.memory_space<vmem>>, %arg8: memref<64x100xbf16, #tpu.memory_space<vmem>>, %arg9: memref<1x100xf32, #tpu.memory_space<vmem>>, %arg10: memref<8x32xf32, #tpu.memory_space<vmem>>, %arg11: memref<8x100xf32, #tpu.memory_space<vmem>>) attributes {dimension_semantics = [#tpu.dimension_semantics<parallel>], iteration_bounds = array<i64: 1>, scalar_prefetch = 0 : i64, scratch_operands = 0 : i64, tpu.core_type = #tpu.core_type<tc>, window_params = [{transform_indices = @transform_0, window_bounds = array<i64: 8, 100>}, {pipeline_mode = #tpu.pipeline_mode<synchronous>, transform_indices = @transform_1, window_bounds = array<i64: 100, 64>}, {pipeline_mode = #tpu.pipeline_mode<synchronous>, transform_indices = @transform_2, window_bounds = array<i64: 1, 64>}, {pipeline_mode = #tpu.pipeline_mode<synchronous>, transform_indices = @transform_3, window_bounds = array<i64: 64, 32>}, {pipeline_mode = #tpu.pipeline_mode<synchronous>, transform_indices = @transform_4, window_bounds = array<i64: 1, 32>}, {pipeline_mode = #tpu.pipeline_mode<synchronous>, transform_indices = @transform_5, window_bounds = array<i64: 32, 64>}, {pipeline_mode = #tpu.pipeline_mode<synchronous>, transform_indices = @transform_6, window_bounds = array<i64: 1, 64>}, {pipeline_mode = #tpu.pipeline_mode<synchronous>, transform_indices = @transform_7, window_bounds = array<i64: 64, 100>}, {pipeline_mode = #tpu.pipeline_mode<synchronous>, transform_indices = @transform_8, window_bounds = array<i64: 1, 100>}, {transform_indices = @transform_9, window_bounds = array<i64: 8, 32>}, {transform_indices = @transform_10, window_bounds = array<i64: 8, 100>}]} {
    %c0 = arith.constant 0 : index
    %c0_0 = arith.constant 0 : index
    %0 = vector.load %arg1[%c0, %c0_0] : memref<8x100xf32, #tpu.memory_space<vmem>>, vector<8x100xf32>
    %1 = arith.truncf %0 : vector<8x100xf32> to vector<8x100xbf16>
    %c0_1 = arith.constant 0 : index
    %c0_2 = arith.constant 0 : index
    %2 = vector.load %arg2[%c0_1, %c0_2] : memref<100x64xbf16, #tpu.memory_space<vmem>>, vector<100x64xbf16>
    %cst = arith.constant dense<0.000000e+00> : vector<8x64xf32>
    %3 = tpu.matmul %1, %2, %cst {dimension_numbers = #tpu.dot_dimension_numbers<[1], [0], [0], [1], [0, 0, 1, 1], [], []>} : vector<8x100xbf16>, vector<100x64xbf16>, vector<8x64xf32> -> vector<8x64xf32>
    %c0_3 = arith.constant 0 : index
    %c0_4 = arith.constant 0 : index
    %4 = vector.load %arg3[%c0_3, %c0_4] : memref<1x64xf32, #tpu.memory_space<vmem>>, vector<1x64xf32>
    %5 = vector.broadcast %4 : vector<1x64xf32> to vector<8x64xf32>
    %6 = arith.addf %3, %5 : vector<8x64xf32>
    %cst_5 = arith.constant 0.000000e+00 : f32
    %7 = vector.broadcast %cst_5 : f32 to vector<8x64xf32>
    %8 = arith.maximumf %6, %7 : vector<8x64xf32>
    %9 = arith.truncf %8 : vector<8x64xf32> to vector<8x64xbf16>
    %c0_6 = arith.constant 0 : index
    %c0_7 = arith.constant 0 : index
    %10 = vector.load %arg4[%c0_6, %c0_7] : memref<64x32xbf16, #tpu.memory_space<vmem>>, vector<64x32xbf16>
    %cst_8 = arith.constant dense<0.000000e+00> : vector<8x32xf32>
    %11 = tpu.matmul %9, %10, %cst_8 {dimension_numbers = #tpu.dot_dimension_numbers<[1], [0], [0], [1], [0, 0, 1, 1], [], []>} : vector<8x64xbf16>, vector<64x32xbf16>, vector<8x32xf32> -> vector<8x32xf32>
    %c0_9 = arith.constant 0 : index
    %c0_10 = arith.constant 0 : index
    %12 = vector.load %arg5[%c0_9, %c0_10] : memref<1x32xf32, #tpu.memory_space<vmem>>, vector<1x32xf32>
    %13 = vector.broadcast %12 : vector<1x32xf32> to vector<8x32xf32>
    %14 = arith.addf %11, %13 : vector<8x32xf32>
    %cst_11 = arith.constant 5.000000e-01 : f32
    %15 = vector.broadcast %cst_11 : f32 to vector<8x32xf32>
    %16 = arith.mulf %15, %14 : vector<8x32xf32>
    %17 = math.tanh %16 : vector<8x32xf32>
    %cst_12 = arith.constant 5.000000e-01 : f32
    %18 = vector.broadcast %cst_12 : f32 to vector<8x32xf32>
    %19 = arith.mulf %18, %17 : vector<8x32xf32>
    %cst_13 = arith.constant 5.000000e-01 : f32
    %20 = vector.broadcast %cst_13 : f32 to vector<8x32xf32>
    %21 = arith.addf %19, %20 : vector<8x32xf32>
    %22 = arith.truncf %21 : vector<8x32xf32> to vector<8x32xbf16>
    %c0_14 = arith.constant 0 : index
    %c0_15 = arith.constant 0 : index
    %23 = vector.load %arg6[%c0_14, %c0_15] : memref<32x64xbf16, #tpu.memory_space<vmem>>, vector<32x64xbf16>
    %cst_16 = arith.constant dense<0.000000e+00> : vector<8x64xf32>
    %24 = tpu.matmul %22, %23, %cst_16 {dimension_numbers = #tpu.dot_dimension_numbers<[1], [0], [0], [1], [0, 0, 1, 1], [], []>} : vector<8x32xbf16>, vector<32x64xbf16>, vector<8x64xf32> -> vector<8x64xf32>
    %c0_17 = arith.constant 0 : index
    %c0_18 = arith.constant 0 : index
    %25 = vector.load %arg7[%c0_17, %c0_18] : memref<1x64xf32, #tpu.memory_space<vmem>>, vector<1x64xf32>
    %26 = vector.broadcast %25 : vector<1x64xf32> to vector<8x64xf32>
    %27 = arith.addf %24, %26 : vector<8x64xf32>
    %cst_19 = arith.constant 0.000000e+00 : f32
    %28 = vector.broadcast %cst_19 : f32 to vector<8x64xf32>
    %29 = arith.maximumf %27, %28 : vector<8x64xf32>
    %30 = arith.truncf %29 : vector<8x64xf32> to vector<8x64xbf16>
    %c0_20 = arith.constant 0 : index
    %c0_21 = arith.constant 0 : index
    %31 = vector.load %arg8[%c0_20, %c0_21] : memref<64x100xbf16, #tpu.memory_space<vmem>>, vector<64x100xbf16>
    %cst_22 = arith.constant dense<0.000000e+00> : vector<8x100xf32>
    %32 = tpu.matmul %30, %31, %cst_22 {dimension_numbers = #tpu.dot_dimension_numbers<[1], [0], [0], [1], [0, 0, 1, 1], [], []>} : vector<8x64xbf16>, vector<64x100xbf16>, vector<8x100xf32> -> vector<8x100xf32>
    %c0_23 = arith.constant 0 : index
    %c0_24 = arith.constant 0 : index
    %33 = vector.load %arg9[%c0_23, %c0_24] : memref<1x100xf32, #tpu.memory_space<vmem>>, vector<1x100xf32>
    %34 = vector.broadcast %33 : vector<1x100xf32> to vector<8x100xf32>
    %35 = arith.addf %32, %34 : vector<8x100xf32>
    %cst_25 = arith.constant 5.000000e-01 : f32
    %36 = vector.broadcast %cst_25 : f32 to vector<8x100xf32>
    %37 = arith.mulf %36, %35 : vector<8x100xf32>
    %38 = math.tanh %37 : vector<8x100xf32>
    %cst_26 = arith.constant 5.000000e-01 : f32
    %39 = vector.broadcast %cst_26 : f32 to vector<8x100xf32>
    %40 = arith.mulf %39, %38 : vector<8x100xf32>
    %cst_27 = arith.constant 5.000000e-01 : f32
    %41 = vector.broadcast %cst_27 : f32 to vector<8x100xf32>
    %42 = arith.addf %40, %41 : vector<8x100xf32>
    %c0_28 = arith.constant 0 : index
    %c0_29 = arith.constant 0 : index
    %43 = vector.load %arg10[%c0_28, %c0_29] : memref<8x32xf32, #tpu.memory_space<vmem>>, vector<8x32xf32>
    tpu.vector_store %arg10[%c0_28, %c0_29], %21 {strides = array<i32>} : memref<8x32xf32, #tpu.memory_space<vmem>>, vector<8x32xf32>,
    %c0_30 = arith.constant 0 : index
    %c0_31 = arith.constant 0 : index
    %44 = vector.load %arg11[%c0_30, %c0_31] : memref<8x100xf32, #tpu.memory_space<vmem>>, vector<8x100xf32>
    tpu.vector_store %arg11[%c0_30, %c0_31], %42 {strides = array<i32>} : memref<8x100xf32, #tpu.memory_space<vmem>>, vector<8x100xf32>,
    return
  }
  func.func @transform_0(%arg0: i32) -> (i32, i32) {
    %c0_i32 = arith.constant 0 : i32
    %c0_i32_0 = arith.constant 0 : i32
    return %arg0, %c0_i32 : i32, i32
  }
  func.func @transform_1(%arg0: i32) -> (i32, i32) {
    %c0_i32 = arith.constant 0 : i32
    %c0_i32_0 = arith.constant 0 : i32
    %c0_i32_1 = arith.constant 0 : i32
    return %c0_i32, %c0_i32_0 : i32, i32
  }
  func.func @transform_2(%arg0: i32) -> (i32, i32) {
    %c0_i32 = arith.constant 0 : i32
    %c0_i32_0 = arith.constant 0 : i32
    %c0_i32_1 = arith.constant 0 : i32
    return %c0_i32, %c0_i32_0 : i32, i32
  }
  func.func @transform_3(%arg0: i32) -> (i32, i32) {
    %c0_i32 = arith.constant 0 : i32
    %c0_i32_0 = arith.constant 0 : i32
    %c0_i32_1 = arith.constant 0 : i32
    return %c0_i32, %c0_i32_0 : i32, i32
  }
  func.func @transform_4(%arg0: i32) -> (i32, i32) {
    %c0_i32 = arith.constant 0 : i32
    %c0_i32_0 = arith.constant 0 : i32
    %c0_i32_1 = arith.constant 0 : i32
    return %c0_i32, %c0_i32_0 : i32, i32
  }
  func.func @transform_5(%arg0: i32) -> (i32, i32) {
    %c0_i32 = arith.constant 0 : i32
    %c0_i32_0 = arith.constant 0 : i32
    %c0_i32_1 = arith.constant 0 : i32
    return %c0_i32, %c0_i32_0 : i32, i32
  }
  func.func @transform_6(%arg0: i32) -> (i32, i32) {
    %c0_i32 = arith.constant 0 : i32
    %c0_i32_0 = arith.constant 0 : i32
    %c0_i32_1 = arith.constant 0 : i32
    return %c0_i32, %c0_i32_0 : i32, i32
  }
  func.func @transform_7(%arg0: i32) -> (i32, i32) {
    %c0_i32 = arith.constant 0 : i32
    %c0_i32_0 = arith.constant 0 : i32
    %c0_i32_1 = arith.constant 0 : i32
    return %c0_i32, %c0_i32_0 : i32, i32
  }
  func.func @transform_8(%arg0: i32) -> (i32, i32) {
    %c0_i32 = arith.constant 0 : i32
    %c0_i32_0 = arith.constant 0 : i32
    %c0_i32_1 = arith.constant 0 : i32
    return %c0_i32, %c0_i32_0 : i32, i32
  }
  func.func @transform_9(%arg0: i32) -> (i32, i32) {
    %c0_i32 = arith.constant 0 : i32
    %c0_i32_0 = arith.constant 0 : i32
    return %arg0, %c0_i32 : i32, i32
  }
  func.func @transform_10(%arg0: i32) -> (i32, i32) {
    %c0_i32 = arith.constant 0 : i32
    %c0_i32_0 = arith.constant 0 : i32
    return %arg0, %c0_i32 : i32, i32
  }
}

</mosaic_0001>

<llo_original>
// kernel: hippocampal_hemisphere_forward.1
$region0: #{hippocampal_hemisphere_forward.1}
  #allocation0 [shape = 'u32[]', space=smem, size = 0x4, offset = 0x4, fixed_abs, tag = 'smem constant byte address 0x4 - core index']
  #allocation1 [shape = 'u32[144,128]{1,0:T(1,128)}', space=vmem, size = 0x12000, scoped, tag = 'internal scratch']
  %s0 = inlined_call_operand.vmem [shape: f32[8,100], index: 0, kind: input, shape index: {}]
  %s1 = inlined_call_operand.vmem [shape: bf16[100,64], index: 1, kind: input, shape index: {}]
  %s2 = inlined_call_operand.vmem [shape: f32[1,64], index: 2, kind: input, shape index: {}]
  %s3 = inlined_call_operand.vmem [shape: bf16[64,32], index: 3, kind: input, shape index: {}]
  %s4 = inlined_call_operand.vmem [shape: f32[1,32], index: 4, kind: input, shape index: {}]
  %s5 = inlined_call_operand.vmem [shape: bf16[32,64], index: 5, kind: input, shape index: {}]
  %s6 = inlined_call_operand.vmem [shape: f32[1,64], index: 6, kind: input, shape index: {}]
  %s7 = inlined_call_operand.vmem [shape: bf16[64,100], index: 7, kind: input, shape index: {}]
  %s8 = inlined_call_operand.vmem [shape: f32[1,100], index: 8, kind: input, shape index: {}]
  %s9 = inlined_call_operand.hbm [shape: f32[8,32], index: 9, kind: output, shape index: {0}]
  %s10 = inlined_call_operand.hbm [shape: f32[8,100], index: 10, kind: output, shape index: {1}]
  %11 = xla_tuple %s9, %s10
  %s12 = sld [smem:[#allocation0]]
  $region54: #{hippocampal_hemisphere_forward.1} parent=0
    _
  %s14 = ssub.s32 1, %s12
  %s15 = scalar_select 0, %s14, %s12
  $region1: #{hippocampal_hemisphere_forward.1} parent=0
    #allocation2 [shape = 'u8[4096]{0}', space=vmem, size = 0x1000, scoped, tag = 'output window, operand 0, single buffered']
    #allocation3 [shape = 's32[1]{0}', space=sflag, size = 0x4, scoped, tag = 'scoped memory for hippocampal_hemisphere_forward.1']
    #allocation4 [shape = 'u8[4096]{0}', space=vmem, size = 0x1000, scoped, tag = 'output window, operand 1, single buffered']
    #allocation5 [shape = 's32[1]{0}', space=sflag, size = 0x4, scoped, tag = 'scoped memory for hippocampal_hemisphere_forward.1']
    %16 = vsyncpa [#allocation3], 0
    %17 = vsyncpa [#allocation5], 0
    // Predicated region
    $region2: #{hippocampal_hemisphere_forward.1} parent=1 // pred_check
      _
    $region3: #{hippocampal_hemisphere_forward.1} parent=1 // pred_check_branch
      %19 = sbr.rel (0) target = $region5
    $region4: #{hippocampal_hemisphere_forward.1} parent=1 // pred_region
      _
    $region5: #{hippocampal_hemisphere_forward.1} parent=1 // pred_fallthru
      _
    // Predicated region
    $region6: #{hippocampal_hemisphere_forward.1} parent=1 // pred_check
      _
    $region7: #{hippocampal_hemisphere_forward.1} parent=1 // pred_check_branch
      %21 = sbr.rel (0) target = $region9
    $region8: #{hippocampal_hemisphere_forward.1} parent=1 // pred_region
      _
    $region9: #{hippocampal_hemisphere_forward.1} parent=1 // pred_fallthru
      _
    // Predicated region
    $region10: #{hippocampal_hemisphere_forward.1} parent=1 // pred_check
      _
    $region11: #{hippocampal_hemisphere_forward.1} parent=1 // pred_check_branch
      %23 = sbr.rel (0) target = $region13
    $region12: #{hippocampal_hemisphere_forward.1} parent=1 // pred_region
      _
    $region13: #{hippocampal_hemisphere_forward.1} parent=1 // pred_fallthru
      _
    // Predicated region
    $region14: #{hippocampal_hemisphere_forward.1} parent=1 // pred_check
      _
    $region15: #{hippocampal_hemisphere_forward.1} parent=1 // pred_check_branch
      %25 = sbr.rel (0) target = $region17
    $region16: #{hippocampal_hemisphere_forward.1} parent=1 // pred_region
      _
    $region17: #{hippocampal_hemisphere_forward.1} parent=1 // pred_fallthru
      _
    // Predicated region
    $region18: #{hippocampal_hemisphere_forward.1} parent=1 // pred_check
      _
    $region19: #{hippocampal_hemisphere_forward.1} parent=1 // pred_check_branch
      %27 = sbr.rel (0) target = $region21
    $region20: #{hippocampal_hemisphere_forward.1} parent=1 // pred_region
      _
    $region21: #{hippocampal_hemisphere_forward.1} parent=1 // pred_fallthru
      _
    // Predicated region
    $region22: #{hippocampal_hemisphere_forward.1} parent=1 // pred_check
      _
    $region23: #{hippocampal_hemisphere_forward.1} parent=1 // pred_check_branch
      %29 = sbr.rel (0) target = $region25
    $region24: #{hippocampal_hemisphere_forward.1} parent=1 // pred_region
      _
    $region25: #{hippocampal_hemisphere_forward.1} parent=1 // pred_fallthru
      _
    // Predicated region
    $region26: #{hippocampal_hemisphere_forward.1} parent=1 // pred_check
      _
    $region27: #{hippocampal_hemisphere_forward.1} parent=1 // pred_check_branch
      %31 = sbr.rel (0) target = $region29
    $region28: #{hippocampal_hemisphere_forward.1} parent=1 // pred_region
      _
    $region29: #{hippocampal_hemisphere_forward.1} parent=1 // pred_fallthru
      _
    // Predicated region
    $region30: #{hippocampal_hemisphere_forward.1} parent=1 // pred_check
      _
    $region31: #{hippocampal_hemisphere_forward.1} parent=1 // pred_check_branch
      %33 = sbr.rel (0) target = $region33
    $region32: #{hippocampal_hemisphere_forward.1} parent=1 // pred_region
      _
    $region33: #{hippocampal_hemisphere_forward.1} parent=1 // pred_fallthru
      _
    // Predicated region
    $region34: #{hippocampal_hemisphere_forward.1} parent=1 // pred_check
      _
    $region35: #{hippocampal_hemisphere_forward.1} parent=1 // pred_check_branch
      %35 = sbr.rel (0) target = $region37
    $region36: #{hippocampal_hemisphere_forward.1} parent=1 // pred_region
      _
    $region37: #{hippocampal_hemisphere_forward.1} parent=1 // pred_fallthru
      _
    %v37 = vld [vmem:[%s0] sm:$0xff]
    %v38 = vpack.c.bf16 %v37, %v37
    %v39 = vld [vmem:[%s1] sm:$0xf]
    %v40 = vld [vmem:[%s1 + $0x4] sm:$0xf]
    %v41 = vld [vmem:[%s1 + $0x8] sm:$0xf]
    %v42 = vld [vmem:[%s1 + $0xc] sm:$0xf]
    %v43 = vld [vmem:[%s1 + $0x10] sm:$0xf]
    %v44 = vld [vmem:[%s1 + $0x14] sm:$0xf]
    %v45 = vld [vmem:[%s1 + $0x18] sm:$0xf]
    %v46 = vld [vmem:[%s1 + $0x1c] sm:$0xf]
    %v47 = vld [vmem:[%s1 + $0x20] sm:$0xf]
    %v48 = vld [vmem:[%s1 + $0x24] sm:$0xf]
    %v49 = vld [vmem:[%s1 + $0x28] sm:$0xf]
    %v50 = vld [vmem:[%s1 + $0x2c] sm:$0xf]
    %v51 = vld [vmem:[%s1 + $0x30] sm:$0x3]
    %v52 = vld [vmem:[%s2] sm:$0x1]
    %v54 = vlaneseq
    %v55 = vshrl.u32 %v54, 7
    %v56 = vsub.s32 0, %v55
    %v57 = vrot.slane %v52, %v56
    %v72 = vunpack.c.l.b16 %v39
    %v73 = vunpack.c.l.b16 %v40
    %v74 = vunpack.c.l.b16 %v41
    %v75 = vunpack.c.l.b16 %v42
    %v76 = vunpack.c.l.b16 %v43
    %v77 = vunpack.c.l.b16 %v44
    %v78 = vunpack.c.l.b16 %v45
    %v79 = vunpack.c.l.b16 %v46
    %v80 = vunpack.c.l.b16 %v47
    %v81 = vunpack.c.l.b16 %v48
    %v82 = vunpack.c.l.b16 %v49
    %v83 = vunpack.c.l.b16 %v50
    %v84 = vunpack.c.l.b16 %v51
    %v85 = vpack.c.b16 %v73, %v72
    %v86 = vpack.c.b16 %v75, %v74
    %v87 = vpack.c.b16 %v77, %v76
    %v88 = vpack.c.b16 %v79, %v78
    %v89 = vpack.c.b16 %v81, %v80
    %v90 = vpack.c.b16 %v83, %v82
    %v91 = vpack.c.b16 %v84, %v84
    %vm98 = vcmask 818176
    %v100 = vsel %vm98, %v38, 0
    %vm102 = vcmask 1041408
    %v104 = vsel %vm102, %v91, 0
    %106 = vmatprep.subr.bf16.mxu0 0
    %107 = vmatpush1.bf16.msra.mxu0 %v85
    %108 = vmatprep.subr.bf16.mxu0 0
    %109 = vmatpush1.bf16.msra.mxu0 %v86
    %110 = vmatprep.subr.bf16.mxu0 0
    %111 = vmatpush1.bf16.msra.mxu0 %v87
    %112 = vmatprep.subr.bf16.mxu0 0
    %113 = vmatpush1.bf16.msra.mxu0 %v88
    %114 = vmatprep.subr.bf16.mxu0 0
    %115 = vmatpush1.bf16.msra.mxu0 %v89
    %116 = vmatprep.subr.bf16.mxu0 0
    %117 = vmatpush1.bf16.msra.mxu0 %v90
    %118 = vmatprep.subr.bf16.mxu0 0
    %119 = vmatpush1.bf16.msra.mxu0 %v104
    %120 = vmatprep.subr.bf16.mxu0 0
    %121 = vmatpush1.bf16.msra.mxu0 0
    %122 = vmatprep.subr.bf16.mxu0 0
    %123 = vmatpush1.bf16.msra.mxu0 0
    %124 = vmatprep.subr.bf16.mxu0 0
    %125 = vmatpush1.bf16.msra.mxu0 0
    %126 = vmatprep.subr.bf16.mxu0 0
    %127 = vmatpush1.bf16.msra.mxu0 0
    %128 = vmatprep.subr.bf16.mxu0 0
    %129 = vmatpush1.bf16.msra.mxu0 0
    %130 = vmatprep.subr.bf16.mxu0 0
    %131 = vmatpush1.bf16.msra.mxu0 0
    %132 = vmatprep.subr.bf16.mxu0 0
    %133 = vmatpush1.bf16.msra.mxu0 0
    %134 = vmatprep.subr.bf16.mxu0 0
    %135 = vmatpush1.bf16.msra.mxu0 0
    %136 = vmatprep.subr.bf16.mxu0 0
    %137 = vmatpush1.bf16.msra.mxu0 0
    %138 = vmatprep.mubr.bf16.mxu0 0
    %139 = vmatmul.mubr.bf16.gmra.mrb[0].mxu0 %v100
    %v140 = vpop.f32.mrb[0].mxu0
    %v141 = vadd.f32 %v57, %v140
    %v142 = vpop.f32.mrb[0].mxu0
    %v143 = vpop.f32.mrb[0].mxu0
    %v144 = vpop.f32.mrb[0].mxu0
    %145 = vdwg.mxu0
    %v146 = vmax.f32 %v141, 0.0
    %v147 = vpack.c.bf16 %v146, %v146
    %v148 = vld [vmem:[%s3] sm:$0xf]
    %v149 = vld [vmem:[%s3 + $0x4] sm:$0xf]
    %v150 = vld [vmem:[%s3 + $0x8] sm:$0xf]
    %v151 = vld [vmem:[%s3 + $0xc] sm:$0xf]
    %v152 = vld [vmem:[%s3 + $0x10] sm:$0xf]
    %v153 = vld [vmem:[%s3 + $0x14] sm:$0xf]
    %v154 = vld [vmem:[%s3 + $0x18] sm:$0xf]
    %v155 = vld [vmem:[%s3 + $0x1c] sm:$0xf]
    %v156 = vld [vmem:[%s4] sm:$0x1]
    %v158 = vlaneseq
    %v159 = vshrl.u32 %v158, 7
    %v160 = vsub.s32 0, %v159
    %v161 = vrot.slane %v156, %v160
    %v171 = vunpack.c.l.b16 %v148
    %v172 = vunpack.c.l.b16 %v149
    %v173 = vunpack.c.l.b16 %v150
    %v174 = vunpack.c.l.b16 %v151
    %v175 = vunpack.c.l.b16 %v152
    %v176 = vunpack.c.l.b16 %v153
    %v177 = vunpack.c.l.b16 %v154
    %v178 = vunpack.c.l.b16 %v155
    %v179 = vpack.c.b16 %v172, %v171
    %v180 = vpack.c.b16 %v174, %v173
    %v181 = vpack.c.b16 %v176, %v175
    %v182 = vpack.c.b16 %v178, %v177
    %vm187 = vcmask 523264
    %v189 = vsel %vm187, %v147, 0
    %191 = vmatprep.subr.bf16.mxu0 0
    %192 = vmatpush1.bf16.msra.mxu0 %v179
    %193 = vmatprep.subr.bf16.mxu0 0
    %194 = vmatpush1.bf16.msra.mxu0 %v180
    %195 = vmatprep.subr.bf16.mxu0 0
    %196 = vmatpush1.bf16.msra.mxu0 %v181
    %197 = vmatprep.subr.bf16.mxu0 0
    %198 = vmatpush1.bf16.msra.mxu0 %v182
    %199 = vmatprep.subr.bf16.mxu0 0
    %200 = vmatpush1.bf16.msra.mxu0 0
    %201 = vmatprep.subr.bf16.mxu0 0
    %202 = vmatpush1.bf16.msra.mxu0 0
    %203 = vmatprep.subr.bf16.mxu0 0
    %204 = vmatpush1.bf16.msra.mxu0 0
    %205 = vmatprep.subr.bf16.mxu0 0
    %206 = vmatpush1.bf16.msra.mxu0 0
    %207 = vmatprep.subr.bf16.mxu0 0
    %208 = vmatpush1.bf16.msra.mxu0 0
    %209 = vmatprep.subr.bf16.mxu0 0
    %210 = vmatpush1.bf16.msra.mxu0 0
    %211 = vmatprep.subr.bf16.mxu0 0
    %212 = vmatpush1.bf16.msra.mxu0 0
    %213 = vmatprep.subr.bf16.mxu0 0
    %214 = vmatpush1.bf16.msra.mxu0 0
    %215 = vmatprep.subr.bf16.mxu0 0
    %216 = vmatpush1.bf16.msra.mxu0 0
    %217 = vmatprep.subr.bf16.mxu0 0
    %218 = vmatpush1.bf16.msra.mxu0 0
    %219 = vmatprep.subr.bf16.mxu0 0
    %220 = vmatpush1.bf16.msra.mxu0 0
    %221 = vmatprep.subr.bf16.mxu0 0
    %222 = vmatpush1.bf16.msra.mxu0 0
    %223 = vmatprep.mubr.bf16.mxu0 0
    %224 = vmatmul.mubr.bf16.gmra.mrb[0].mxu0 %v189
    %v225 = vpop.f32.mrb[0].mxu0
    %v226 = vadd.f32 %v161, %v225
    %v227 = vpop.f32.mrb[0].mxu0
    %v228 = vpop.f32.mrb[0].mxu0
    %v229 = vpop.f32.mrb[0].mxu0
    %230 = vdwg.mxu0
    %v231 = vmul.f32 %v226, 0.5
    %v232 = vtanh.pop %v231
    %v233 = vmul.f32 %v232, 0.5
    %v234 = vadd.f32 %v233, 0.5
    %v235 = vpack.c.bf16 %v234, %v234
    %v236 = vld [vmem:[%s5] sm:$0xf]
    %v237 = vld [vmem:[%s5 + $0x4] sm:$0xf]
    %v238 = vld [vmem:[%s5 + $0x8] sm:$0xf]
    %v239 = vld [vmem:[%s5 + $0xc] sm:$0xf]
    %v240 = vld [vmem:[%s6] sm:$0x1]
    %v242 = vlaneseq
    %v243 = vshrl.u32 %v242, 7
    %v244 = vsub.s32 0, %v243
    %v245 = vrot.slane %v240, %v244
    %v251 = vunpack.c.l.b16 %v236
    %v252 = vunpack.c.l.b16 %v237
    %v253 = vunpack.c.l.b16 %v238
    %v254 = vunpack.c.l.b16 %v239
    %v255 = vpack.c.b16 %v252, %v251
    %v256 = vpack.c.b16 %v254, %v253
    %vm259 = vcmask 261120
    %v261 = vsel %vm259, %v235, 0
    %263 = vmatprep.subr.bf16.mxu0 0
    %264 = vmatpush1.bf16.msra.mxu0 %v255
    %265 = vmatprep.subr.bf16.mxu0 0
    %266 = vmatpush1.bf16.msra.mxu0 %v256
    %267 = vmatprep.subr.bf16.mxu0 0
    %268 = vmatpush1.bf16.msra.mxu0 0
    %269 = vmatprep.subr.bf16.mxu0 0
    %270 = vmatpush1.bf16.msra.mxu0 0
    %271 = vmatprep.subr.bf16.mxu0 0
    %272 = vmatpush1.bf16.msra.mxu0 0
    %273 = vmatprep.subr.bf16.mxu0 0
    %274 = vmatpush1.bf16.msra.mxu0 0
    %275 = vmatprep.subr.bf16.mxu0 0
    %276 = vmatpush1.bf16.msra.mxu0 0
    %277 = vmatprep.subr.bf16.mxu0 0
    %278 = vmatpush1.bf16.msra.mxu0 0
    %279 = vmatprep.subr.bf16.mxu0 0
    %280 = vmatpush1.bf16.msra.mxu0 0
    %281 = vmatprep.subr.bf16.mxu0 0
    %282 = vmatpush1.bf16.msra.mxu0 0
    %283 = vmatprep.subr.bf16.mxu0 0
    %284 = vmatpush1.bf16.msra.mxu0 0
    %285 = vmatprep.subr.bf16.mxu0 0
    %286 = vmatpush1.bf16.msra.mxu0 0
    %287 = vmatprep.subr.bf16.mxu0 0
    %288 = vmatpush1.bf16.msra.mxu0 0
    %289 = vmatprep.subr.bf16.mxu0 0
    %290 = vmatpush1.bf16.msra.mxu0 0
    %291 = vmatprep.subr.bf16.mxu0 0
    %292 = vmatpush1.bf16.msra.mxu0 0
    %293 = vmatprep.subr.bf16.mxu0 0
    %294 = vmatpush1.bf16.msra.mxu0 0
    %295 = vmatprep.mubr.bf16.mxu0 0
    %296 = vmatmul.mubr.bf16.gmra.mrb[0].mxu0 %v261
    %v297 = vpop.f32.mrb[0].mxu0
    %v298 = vadd.f32 %v245, %v297
    %v299 = vpop.f32.mrb[0].mxu0
    %v300 = vpop.f32.mrb[0].mxu0
    %v301 = vpop.f32.mrb[0].mxu0
    %302 = vdwg.mxu0
    %v303 = vmax.f32 %v298, 0.0
    %v304 = vpack.c.bf16 %v303, %v303
    %v305 = vld [vmem:[%s7] sm:$0xf]
    %v306 = vld [vmem:[%s7 + $0x4] sm:$0xf]
    %v307 = vld [vmem:[%s7 + $0x8] sm:$0xf]
    %v308 = vld [vmem:[%s7 + $0xc] sm:$0xf]
    %v309 = vld [vmem:[%s7 + $0x10] sm:$0xf]
    %v310 = vld [vmem:[%s7 + $0x14] sm:$0xf]
    %v311 = vld [vmem:[%s7 + $0x18] sm:$0xf]
    %v312 = vld [vmem:[%s7 + $0x1c] sm:$0xf]
    %v313 = vld [vmem:[%s8] sm:$0x1]
    %v315 = vlaneseq
    %v316 = vshrl.u32 %v315, 7
    %v317 = vsub.s32 0, %v316
    %v318 = vrot.slane %v313, %v317
    %v328 = vunpack.c.l.b16 %v305
    %v329 = vunpack.c.l.b16 %v306
    %v330 = vunpack.c.l.b16 %v307
    %v331 = vunpack.c.l.b16 %v308
    %v332 = vunpack.c.l.b16 %v309
    %v333 = vunpack.c.l.b16 %v310
    %v334 = vunpack.c.l.b16 %v311
    %v335 = vunpack.c.l.b16 %v312
    %v336 = vpack.c.b16 %v329, %v328
    %v337 = vpack.c.b16 %v331, %v330
    %v338 = vpack.c.b16 %v333, %v332
    %v339 = vpack.c.b16 %v335, %v334
    %v345 = vsel %vm187, %v304, 0
    %347 = vmatprep.subr.bf16.mxu0 0
    %348 = vmatpush1.bf16.msra.mxu0 %v336
    %349 = vmatprep.subr.bf16.mxu0 0
    %350 = vmatpush1.bf16.msra.mxu0 %v337
    %351 = vmatprep.subr.bf16.mxu0 0
    %352 = vmatpush1.bf16.msra.mxu0 %v338
    %353 = vmatprep.subr.bf16.mxu0 0
    %354 = vmatpush1.bf16.msra.mxu0 %v339
    %355 = vmatprep.subr.bf16.mxu0 0
    %356 = vmatpush1.bf16.msra.mxu0 0
    %357 = vmatprep.subr.bf16.mxu0 0
    %358 = vmatpush1.bf16.msra.mxu0 0
    %359 = vmatprep.subr.bf16.mxu0 0
    %360 = vmatpush1.bf16.msra.mxu0 0
    %361 = vmatprep.subr.bf16.mxu0 0
    %362 = vmatpush1.bf16.msra.mxu0 0
    %363 = vmatprep.subr.bf16.mxu0 0
    %364 = vmatpush1.bf16.msra.mxu0 0
    %365 = vmatprep.subr.bf16.mxu0 0
    %366 = vmatpush1.bf16.msra.mxu0 0
    %367 = vmatprep.subr.bf16.mxu0 0
    %368 = vmatpush1.bf16.msra.mxu0 0
    %369 = vmatprep.subr.bf16.mxu0 0
    %370 = vmatpush1.bf16.msra.mxu0 0
    %371 = vmatprep.subr.bf16.mxu0 0
    %372 = vmatpush1.bf16.msra.mxu0 0
    %373 = vmatprep.subr.bf16.mxu0 0
    %374 = vmatpush1.bf16.msra.mxu0 0
    %375 = vmatprep.subr.bf16.mxu0 0
    %376 = vmatpush1.bf16.msra.mxu0 0
    %377 = vmatprep.subr.bf16.mxu0 0
    %378 = vmatpush1.bf16.msra.mxu0 0
    %379 = vmatprep.mubr.bf16.mxu0 0
    %380 = vmatmul.mubr.bf16.gmra.mrb[0].mxu0 %v345
    %v381 = vpop.f32.mrb[0].mxu0
    %v382 = vadd.f32 %v318, %v381
    %v383 = vpop.f32.mrb[0].mxu0
    %v384 = vpop.f32.mrb[0].mxu0
    %v385 = vpop.f32.mrb[0].mxu0
    %386 = vdwg.mxu0
    %v387 = vmul.f32 %v382, 0.5
    %v388 = vtanh.pop %v387
    %v389 = vmul.f32 %v388, 0.5
    %v390 = vadd.f32 %v389, 0.5
    %391 = vst.msk [vmem:[#allocation2] sm:$0xff] %vm259, %v234
    %392 = vst.msk [vmem:[#allocation4] sm:$0xff] %vm98, %v390
    // Predicated region
    $region38: #{hippocampal_hemisphere_forward.1} parent=1 // pred_check
      _
    $region39: #{hippocampal_hemisphere_forward.1} parent=1 // pred_check_branch
      %394 = sbr.rel (0) target = $region41
    $region40: #{hippocampal_hemisphere_forward.1} parent=1 // pred_region
      %s396 = ssub.s32 128, 128
      %397 = vsyncadd [#allocation3], %s396
      %s399 = sshll.u32 [#allocation2], 4
      %s400 = int_to_ptr.vmem [resolvable:$true] %s399
      %402 = dma.vmem_to_hbm [thread:$0]  %s400, 128, %s9, [#allocation3]
    $region41: #{hippocampal_hemisphere_forward.1} parent=1 // pred_fallthru
      _
    // Predicated region
    $region42: #{hippocampal_hemisphere_forward.1} parent=1 // pred_check
      _
    $region43: #{hippocampal_hemisphere_forward.1} parent=1 // pred_check_branch
      %404 = sbr.rel (0) target = $region45
    $region44: #{hippocampal_hemisphere_forward.1} parent=1 // pred_region
      %s406 = ssub.s32 128, 128
      %407 = vsyncadd [#allocation5], %s406
      %s409 = sshll.u32 [#allocation4], 4
      %s410 = int_to_ptr.vmem [resolvable:$true] %s409
      %412 = dma.vmem_to_hbm [thread:$0]  %s410, 128, %s10, [#allocation5]
    $region45: #{hippocampal_hemisphere_forward.1} parent=1 // pred_fallthru
      _
    // Predicated region
    $region46: #{hippocampal_hemisphere_forward.1} parent=1 // pred_check
      _
    $region47: #{hippocampal_hemisphere_forward.1} parent=1 // pred_check_branch
      %414 = sbr.rel (0) target = $region49
    $region48: #{hippocampal_hemisphere_forward.1} parent=1 // pred_region
      %415 = dma.done [#allocation3], 128
    $region49: #{hippocampal_hemisphere_forward.1} parent=1 // pred_fallthru
      _
    // Predicated region
    $region50: #{hippocampal_hemisphere_forward.1} parent=1 // pred_check
      _
    $region51: #{hippocampal_hemisphere_forward.1} parent=1 // pred_check_branch
      %417 = sbr.rel (0) target = $region53
    $region52: #{hippocampal_hemisphere_forward.1} parent=1 // pred_region
      %418 = dma.done [#allocation5], 128
    $region53: #{hippocampal_hemisphere_forward.1} parent=1 // pred_fallthru
      _
    %419 = vsyncpa [#allocation3], 1
    %420 = vsyncpa [#allocation5], 1

</llo_original>
